<compile_context>
chip_gen: v5e
topology: v5e:2x2
jax: 0.10.0
libtpu: 0.0.40
codegen_flags: <defaults>
</compile_context>

<pallas_src>
import functools

import jax
import jax.numpy as jnp
from jax.experimental import pallas as pl
from jax.experimental.pallas import tpu as pltpu

NEG_SLOPE = 0.01          # nn.LeakyReLU() default negative_slope
K_PAD = 896               # 784 padded up to 7 * 128 lanes
H1, H2 = 256, 64
OUT_PAD = 128             # 10 padded up to one full lane group
DEFAULT_BLOCK_B = 1024    # batch tile (multiple of 256 for MXU M rows)


def _round_up(n, m):
    return ((n + m - 1) // m) * m


def _leaky_relu(x):
    return jnp.where(x > 0, x, NEG_SLOPE * x)


def mlp_kernel(x_ref, w1_ref, b1_ref, w2_ref, b2_ref, w3_ref, b3_ref, o_ref):
    # linear1 + LeakyReLU  (bf16 matmul, f32 accumulate, f32 elementwise)
    h = jnp.dot(x_ref[...], w1_ref[...], preferred_element_type=jnp.float32)
    h = _leaky_relu(h + b1_ref[...])
    # linear2 + LeakyReLU
    h = jnp.dot(h.astype(jnp.bfloat16), w2_ref[...],
                preferred_element_type=jnp.float32)
    h = _leaky_relu(h + b2_ref[...])
    # linear_out
    h = jnp.dot(h.astype(jnp.bfloat16), w3_ref[...],
                preferred_element_type=jnp.float32)
    o_ref[...] = (h + b3_ref[...]).astype(o_ref.dtype)


@functools.partial(jax.jit, static_argnames=("block_b",))
def feedforward_mnist(x, params, *, block_b=DEFAULT_BLOCK_B):
    """x: [B, 784] float32 -> logits [B, 10] float32."""
    w1, b1, w2, b2, w3, b3 = params
    B, F_in = x.shape

    # ---- batch tiling (TB multiple of 8; pad B up to a TB multiple) ----
    TB = min(block_b, _round_up(B, 8))
    B_pad = _round_up(B, TB)
    grid = (B_pad // TB,)

    # ---- lane-dense, bf16 operands (zero padding keeps math exact) ----
    x_p = jnp.zeros((B_pad, K_PAD), jnp.bfloat16)
    x_p = x_p.at[:B, :F_in].set(x.astype(jnp.bfloat16))
    w1_p = jnp.zeros((K_PAD, H1), jnp.bfloat16).at[:F_in, :].set(
        w1.astype(jnp.bfloat16))
    w2_p = w2.astype(jnp.bfloat16)
    w3_p = jnp.zeros((H2, OUT_PAD), jnp.bfloat16).at[:, :10].set(
        w3.astype(jnp.bfloat16))
    b1_p = b1.astype(jnp.float32)                       # (1, 256)
    b2_p = b2.astype(jnp.float32)                       # (1, 64)
    b3_p = jnp.zeros((1, OUT_PAD), jnp.float32).at[:, :10].set(
        b3.astype(jnp.float32))

    out_padded = pl.pallas_call(
        mlp_kernel,
        out_shape=jax.ShapeDtypeStruct((B_pad, OUT_PAD), jnp.float32),
        grid=grid,
        in_specs=[
            # x: tiled over batch, double-buffered by the Pallas pipeline.
            pl.BlockSpec((TB, K_PAD), lambda i: (i, 0)),
            # weights / biases: constant index_map -> loaded once, VMEM-resident.
            pl.BlockSpec((K_PAD, H1), lambda i: (0, 0)),
            pl.BlockSpec((1, H1), lambda i: (0, 0)),
            pl.BlockSpec((H1, H2), lambda i: (0, 0)),
            pl.BlockSpec((1, H2), lambda i: (0, 0)),
            pl.BlockSpec((H2, OUT_PAD), lambda i: (0, 0)),
            pl.BlockSpec((1, OUT_PAD), lambda i: (0, 0)),
        ],
        out_specs=pl.BlockSpec((TB, OUT_PAD), lambda i: (i, 0)),
        compiler_params=pltpu.CompilerParams(
            # batch-grid steps are independent -> shard across v7x's 2 TCs.
            dimension_semantics=("parallel",),
            # headroom above the 16 MiB v5e default scoped VMEM, still well
            # under v7x's 64 MiB physical VMEM.
            vmem_limit_bytes=48 * 1024 * 1024,
        ),
    )(x_p, w1_p, b1_p, w2_p, b2_p, w3_p, b3_p)

    return out_padded[:B, :10]


def init_params(key):
    """Deterministic init mimicking nn.Linear's uniform(-1/sqrt(fan_in), ...).
    Weights stored as (in, out) so the kernel computes x @ W + b."""
    dims = [(28 * 28, 256), (256, 64), (64, 10)]
    params = []
    for fan_in, fan_out in dims:
        key, kw, kb = jax.random.split(key, 3)
        bound = 1.0 / (fan_in ** 0.5)
        w = jax.random.uniform(kw, (fan_in, fan_out), jnp.float32, -bound, bound)
        b = jax.random.uniform(kb, (1, fan_out), jnp.float32, -bound, bound)
        params += [w, b]
    return tuple(params)


if __name__ == "__main__":
    key = jax.random.PRNGKey(0)
    key, kx = jax.random.split(key)
    B = 8
    x = jax.random.normal(kx, (B, 28 * 28), jnp.float32)
    params = init_params(key)

    out = feedforward_mnist(x, params)
    out = jax.block_until_ready(out)
    assert out.shape == (B, 10)

    w1, b1, w2, b2, w3, b3 = params

    # Reference with the same bf16 input/weight quantization (tight tolerance).
    def q(a):
        return a.astype(jnp.bfloat16).astype(jnp.float32)
    h = q(x) @ q(w1) + b1
    h = jnp.where(h > 0, h, NEG_SLOPE * h)
    h = q(h) @ q(w2) + b2
    h = jnp.where(h > 0, h, NEG_SLOPE * h)
    ref_bf16 = q(h) @ q(w3) + b3
    assert jnp.max(jnp.abs(out - ref_bf16)) < 2e-3, "mismatch vs bf16 reference"

    # Full-f32 reference (loose tolerance accounts for bf16 inputs/weights).
    h = x @ w1 + b1
    h = jnp.where(h > 0, h, NEG_SLOPE * h)
    h = h @ w2 + b2
    h = jnp.where(h > 0, h, NEG_SLOPE * h)
    ref_f32 = h @ w3 + b3
    assert jnp.max(jnp.abs(out - ref_f32)) < 5e-2, "mismatch vs f32 reference"

    print("KERNEL_OK")
</pallas_src>

<mosaic_0001>
module attributes {stable_mosaic.version = 11 : i64} {
  func.func @mlp_kernel(%arg0: i32, %arg1: memref<8x896xbf16, #tpu.memory_space<vmem>>, %arg2: memref<896x256xbf16, #tpu.memory_space<vmem>>, %arg3: memref<1x256xf32, #tpu.memory_space<vmem>>, %arg4: memref<256x64xbf16, #tpu.memory_space<vmem>>, %arg5: memref<1x64xf32, #tpu.memory_space<vmem>>, %arg6: memref<64x128xbf16, #tpu.memory_space<vmem>>, %arg7: memref<1x128xf32, #tpu.memory_space<vmem>>, %arg8: memref<8x128xf32, #tpu.memory_space<vmem>>) attributes {dimension_semantics = [#tpu.dimension_semantics<parallel>], iteration_bounds = array<i64: 1>, scalar_prefetch = 0 : i64, scratch_operands = 0 : i64, tpu.core_type = #tpu.core_type<tc>, window_params = [{transform_indices = @transform_0, window_bounds = array<i64: 8, 896>}, {pipeline_mode = #tpu.pipeline_mode<synchronous>, transform_indices = @transform_1, window_bounds = array<i64: 896, 256>}, {pipeline_mode = #tpu.pipeline_mode<synchronous>, transform_indices = @transform_2, window_bounds = array<i64: 1, 256>}, {pipeline_mode = #tpu.pipeline_mode<synchronous>, transform_indices = @transform_3, window_bounds = array<i64: 256, 64>}, {pipeline_mode = #tpu.pipeline_mode<synchronous>, transform_indices = @transform_4, window_bounds = array<i64: 1, 64>}, {pipeline_mode = #tpu.pipeline_mode<synchronous>, transform_indices = @transform_5, window_bounds = array<i64: 64, 128>}, {pipeline_mode = #tpu.pipeline_mode<synchronous>, transform_indices = @transform_6, window_bounds = array<i64: 1, 128>}, {transform_indices = @transform_7, window_bounds = array<i64: 8, 128>}]} {
    %c0 = arith.constant 0 : index
    %c0_0 = arith.constant 0 : index
    %0 = vector.load %arg1[%c0, %c0_0] : memref<8x896xbf16, #tpu.memory_space<vmem>>, vector<8x896xbf16>
    %c0_1 = arith.constant 0 : index
    %c0_2 = arith.constant 0 : index
    %1 = vector.load %arg2[%c0_1, %c0_2] : memref<896x256xbf16, #tpu.memory_space<vmem>>, vector<896x256xbf16>
    %cst = arith.constant dense<0.000000e+00> : vector<8x256xf32>
    %2 = tpu.matmul %0, %1, %cst {dimension_numbers = #tpu.dot_dimension_numbers<[1], [0], [0], [1], [0, 0, 1, 1], [], []>} : vector<8x896xbf16>, vector<896x256xbf16>, vector<8x256xf32> -> vector<8x256xf32>
    %c0_3 = arith.constant 0 : index
    %c0_4 = arith.constant 0 : index
    %3 = vector.load %arg3[%c0_3, %c0_4] : memref<1x256xf32, #tpu.memory_space<vmem>>, vector<1x256xf32>
    %4 = vector.broadcast %3 : vector<1x256xf32> to vector<8x256xf32>
    %5 = arith.addf %2, %4 : vector<8x256xf32>
    %cst_5 = arith.constant 0.000000e+00 : f32
    %6 = vector.broadcast %cst_5 : f32 to vector<8x256xf32>
    %7 = arith.cmpf ogt, %5, %6 : vector<8x256xf32>
    %cst_6 = arith.constant 0.00999999977 : f32
    %8 = vector.broadcast %cst_6 : f32 to vector<8x256xf32>
    %9 = arith.mulf %8, %5 : vector<8x256xf32>
    %10 = arith.select %7, %5, %9 : vector<8x256xi1>, vector<8x256xf32>
    %11 = arith.truncf %10 : vector<8x256xf32> to vector<8x256xbf16>
    %c0_7 = arith.constant 0 : index
    %c0_8 = arith.constant 0 : index
    %12 = vector.load %arg4[%c0_7, %c0_8] : memref<256x64xbf16, #tpu.memory_space<vmem>>, vector<256x64xbf16>
    %cst_9 = arith.constant dense<0.000000e+00> : vector<8x64xf32>
    %13 = tpu.matmul %11, %12, %cst_9 {dimension_numbers = #tpu.dot_dimension_numbers<[1], [0], [0], [1], [0, 0, 1, 1], [], []>} : vector<8x256xbf16>, vector<256x64xbf16>, vector<8x64xf32> -> vector<8x64xf32>
    %c0_10 = arith.constant 0 : index
    %c0_11 = arith.constant 0 : index
    %14 = vector.load %arg5[%c0_10, %c0_11] : memref<1x64xf32, #tpu.memory_space<vmem>>, vector<1x64xf32>
    %15 = vector.broadcast %14 : vector<1x64xf32> to vector<8x64xf32>
    %16 = arith.addf %13, %15 : vector<8x64xf32>
    %cst_12 = arith.constant 0.000000e+00 : f32
    %17 = vector.broadcast %cst_12 : f32 to vector<8x64xf32>
    %18 = arith.cmpf ogt, %16, %17 : vector<8x64xf32>
    %cst_13 = arith.constant 0.00999999977 : f32
    %19 = vector.broadcast %cst_13 : f32 to vector<8x64xf32>
    %20 = arith.mulf %19, %16 : vector<8x64xf32>
    %21 = arith.select %18, %16, %20 : vector<8x64xi1>, vector<8x64xf32>
    %22 = arith.truncf %21 : vector<8x64xf32> to vector<8x64xbf16>
    %c0_14 = arith.constant 0 : index
    %c0_15 = arith.constant 0 : index
    %23 = vector.load %arg6[%c0_14, %c0_15] : memref<64x128xbf16, #tpu.memory_space<vmem>>, vector<64x128xbf16>
    %cst_16 = arith.constant dense<0.000000e+00> : vector<8x128xf32>
    %24 = tpu.matmul %22, %23, %cst_16 {dimension_numbers = #tpu.dot_dimension_numbers<[1], [0], [0], [1], [0, 0, 1, 1], [], []>} : vector<8x64xbf16>, vector<64x128xbf16>, vector<8x128xf32> -> vector<8x128xf32>
    %c0_17 = arith.constant 0 : index
    %c0_18 = arith.constant 0 : index
    %25 = vector.load %arg7[%c0_17, %c0_18] : memref<1x128xf32, #tpu.memory_space<vmem>>, vector<1x128xf32>
    %26 = vector.broadcast %25 : vector<1x128xf32> to vector<8x128xf32>
    %27 = arith.addf %24, %26 : vector<8x128xf32>
    %c0_19 = arith.constant 0 : index
    %c0_20 = arith.constant 0 : index
    %28 = vector.load %arg8[%c0_19, %c0_20] : memref<8x128xf32, #tpu.memory_space<vmem>>, vector<8x128xf32>
    tpu.vector_store %arg8[%c0_19, %c0_20], %27 {strides = array<i32>} : memref<8x128xf32, #tpu.memory_space<vmem>>, vector<8x128xf32>,
    return
  }
  func.func @transform_0(%arg0: i32) -> (i32, i32) {
    %c0_i32 = arith.constant 0 : i32
    %c0_i32_0 = arith.constant 0 : i32
    return %arg0, %c0_i32 : i32, i32
  }
  func.func @transform_1(%arg0: i32) -> (i32, i32) {
    %c0_i32 = arith.constant 0 : i32
    %c0_i32_0 = arith.constant 0 : i32
    %c0_i32_1 = arith.constant 0 : i32
    return %c0_i32, %c0_i32_0 : i32, i32
  }
  func.func @transform_2(%arg0: i32) -> (i32, i32) {
    %c0_i32 = arith.constant 0 : i32
    %c0_i32_0 = arith.constant 0 : i32
    %c0_i32_1 = arith.constant 0 : i32
    return %c0_i32, %c0_i32_0 : i32, i32
  }
  func.func @transform_3(%arg0: i32) -> (i32, i32) {
    %c0_i32 = arith.constant 0 : i32
    %c0_i32_0 = arith.constant 0 : i32
    %c0_i32_1 = arith.constant 0 : i32
    return %c0_i32, %c0_i32_0 : i32, i32
  }
  func.func @transform_4(%arg0: i32) -> (i32, i32) {
    %c0_i32 = arith.constant 0 : i32
    %c0_i32_0 = arith.constant 0 : i32
    %c0_i32_1 = arith.constant 0 : i32
    return %c0_i32, %c0_i32_0 : i32, i32
  }
  func.func @transform_5(%arg0: i32) -> (i32, i32) {
    %c0_i32 = arith.constant 0 : i32
    %c0_i32_0 = arith.constant 0 : i32
    %c0_i32_1 = arith.constant 0 : i32
    return %c0_i32, %c0_i32_0 : i32, i32
  }
  func.func @transform_6(%arg0: i32) -> (i32, i32) {
    %c0_i32 = arith.constant 0 : i32
    %c0_i32_0 = arith.constant 0 : i32
    %c0_i32_1 = arith.constant 0 : i32
    return %c0_i32, %c0_i32_0 : i32, i32
  }
  func.func @transform_7(%arg0: i32) -> (i32, i32) {
    %c0_i32 = arith.constant 0 : i32
    %c0_i32_0 = arith.constant 0 : i32
    return %arg0, %c0_i32 : i32, i32
  }
}

</mosaic_0001>

<llo_original>
// kernel: feedforward_mnist.1
$region0: #{feedforward_mnist.1}
  #allocation0 [shape = 'u32[]', space=smem, size = 0x4, offset = 0x4, fixed_abs, tag = 'smem constant byte address 0x4 - core index']
  #allocation1 [shape = 'u32[72,128]{1,0:T(1,128)}', space=vmem, size = 0x9000, scoped, tag = 'internal scratch']
  %s0 = inlined_call_operand.vmem [shape: bf16[8,896], index: 0, kind: input, shape index: {}]
  %s1 = inlined_call_operand.vmem [shape: bf16[896,256], index: 1, kind: input, shape index: {}]
  %s2 = inlined_call_operand.vmem [shape: f32[1,256], index: 2, kind: input, shape index: {}]
  %s3 = inlined_call_operand.vmem [shape: bf16[256,64], index: 3, kind: input, shape index: {}]
  %s4 = inlined_call_operand.vmem [shape: f32[1,64], index: 4, kind: input, shape index: {}]
  %s5 = inlined_call_operand.vmem [shape: bf16[64,128], index: 5, kind: input, shape index: {}]
  %s6 = inlined_call_operand.vmem [shape: f32[1,128], index: 6, kind: input, shape index: {}]
  %s7 = inlined_call_operand.hbm [shape: f32[8,128], index: 7, kind: output, shape index: {}]
  %s8 = sld [smem:[#allocation0]]
  $region38: #{feedforward_mnist.1} parent=0
    _
  %s10 = ssub.s32 1, %s8
  %s11 = scalar_select 0, %s10, %s8
  $region1: #{feedforward_mnist.1} parent=0
    #allocation2 [shape = 'u8[4096]{0}', space=vmem, size = 0x1000, scoped, tag = 'output window, operand 0, single buffered']
    #allocation3 [shape = 's32[1]{0}', space=sflag, size = 0x4, scoped, tag = 'scoped memory for feedforward_mnist.1']
    %12 = vsyncpa [#allocation3], 0
    // Predicated region
    $region2: #{feedforward_mnist.1} parent=1 // pred_check
      _
    $region3: #{feedforward_mnist.1} parent=1 // pred_check_branch
      %14 = sbr.rel (0) target = $region5
    $region4: #{feedforward_mnist.1} parent=1 // pred_region
      _
    $region5: #{feedforward_mnist.1} parent=1 // pred_fallthru
      _
    // Predicated region
    $region6: #{feedforward_mnist.1} parent=1 // pred_check
      _
    $region7: #{feedforward_mnist.1} parent=1 // pred_check_branch
      %16 = sbr.rel (0) target = $region9
    $region8: #{feedforward_mnist.1} parent=1 // pred_region
      _
    $region9: #{feedforward_mnist.1} parent=1 // pred_fallthru
      _
    // Predicated region
    $region10: #{feedforward_mnist.1} parent=1 // pred_check
      _
    $region11: #{feedforward_mnist.1} parent=1 // pred_check_branch
      %18 = sbr.rel (0) target = $region13
    $region12: #{feedforward_mnist.1} parent=1 // pred_region
      _
    $region13: #{feedforward_mnist.1} parent=1 // pred_fallthru
      _
    // Predicated region
    $region14: #{feedforward_mnist.1} parent=1 // pred_check
      _
    $region15: #{feedforward_mnist.1} parent=1 // pred_check_branch
      %20 = sbr.rel (0) target = $region17
    $region16: #{feedforward_mnist.1} parent=1 // pred_region
      _
    $region17: #{feedforward_mnist.1} parent=1 // pred_fallthru
      _
    // Predicated region
    $region18: #{feedforward_mnist.1} parent=1 // pred_check
      _
    $region19: #{feedforward_mnist.1} parent=1 // pred_check_branch
      %22 = sbr.rel (0) target = $region21
    $region20: #{feedforward_mnist.1} parent=1 // pred_region
      _
    $region21: #{feedforward_mnist.1} parent=1 // pred_fallthru
      _
    // Predicated region
    $region22: #{feedforward_mnist.1} parent=1 // pred_check
      _
    $region23: #{feedforward_mnist.1} parent=1 // pred_check_branch
      %24 = sbr.rel (0) target = $region25
    $region24: #{feedforward_mnist.1} parent=1 // pred_region
      _
    $region25: #{feedforward_mnist.1} parent=1 // pred_fallthru
      _
    // Predicated region
    $region26: #{feedforward_mnist.1} parent=1 // pred_check
      _
    $region27: #{feedforward_mnist.1} parent=1 // pred_check_branch
      %26 = sbr.rel (0) target = $region29
    $region28: #{feedforward_mnist.1} parent=1 // pred_region
      _
    $region29: #{feedforward_mnist.1} parent=1 // pred_fallthru
      _
    %v28 = vld [vmem:[%s0] sm:$0xff]
    %v29 = vld [vmem:[%s0 + $0x8] sm:$0xff]
    %v30 = vld [vmem:[%s0 + $0x10] sm:$0xff]
    %v31 = vld [vmem:[%s0 + $0x18] sm:$0xf]
    %v32 = vld [vmem:[%s1] sm:$0xff]
    %v33 = vld [vmem:[%s1 + $0x8] sm:$0xff]
    %v34 = vld [vmem:[%s1 + $0x10] sm:$0xff]
    %v35 = vld [vmem:[%s1 + $0x18] sm:$0xff]
    %v36 = vld [vmem:[%s1 + $0x20] sm:$0xff]
    %v37 = vld [vmem:[%s1 + $0x28] sm:$0xff]
    %v38 = vld [vmem:[%s1 + $0x30] sm:$0xff]
    %v39 = vld [vmem:[%s1 + $0x38] sm:$0xff]
    %v40 = vld [vmem:[%s1 + $0x40] sm:$0xff]
    %v41 = vld [vmem:[%s1 + $0x48] sm:$0xff]
    %v42 = vld [vmem:[%s1 + $0x50] sm:$0xff]
    %v43 = vld [vmem:[%s1 + $0x58] sm:$0xff]
    %v44 = vld [vmem:[%s1 + $0x60] sm:$0xff]
    %v45 = vld [vmem:[%s1 + $0x68] sm:$0xff]
    %v46 = vld [vmem:[%s1 + $0x70] sm:$0xff]
    %v47 = vld [vmem:[%s1 + $0x78] sm:$0xff]
    %v48 = vld [vmem:[%s1 + $0x80] sm:$0xff]
    %v49 = vld [vmem:[%s1 + $0x88] sm:$0xff]
    %v50 = vld [vmem:[%s1 + $0x90] sm:$0xff]
    %v51 = vld [vmem:[%s1 + $0x98] sm:$0xff]
    %v52 = vld [vmem:[%s1 + $0xa0] sm:$0xff]
    %v53 = vld [vmem:[%s1 + $0xa8] sm:$0xff]
    %v54 = vld [vmem:[%s1 + $0xb0] sm:$0xff]
    %v55 = vld [vmem:[%s1 + $0xb8] sm:$0xff]
    %v56 = vld [vmem:[%s1 + $0xc0] sm:$0xff]
    %v57 = vld [vmem:[%s1 + $0xc8] sm:$0xff]
    %v58 = vld [vmem:[%s1 + $0xd0] sm:$0xff]
    %v59 = vld [vmem:[%s1 + $0xd8] sm:$0xff]
    %v60 = vld [vmem:[%s1 + $0xe0] sm:$0xff]
    %v61 = vld [vmem:[%s1 + $0xe8] sm:$0xff]
    %v62 = vld [vmem:[%s1 + $0xf0] sm:$0xff]
    %v63 = vld [vmem:[%s1 + $0xf8] sm:$0xff]
    %v64 = vld [vmem:[%s1 + $0x100] sm:$0xff]
    %v65 = vld [vmem:[%s1 + $0x108] sm:$0xff]
    %v66 = vld [vmem:[%s1 + $0x110] sm:$0xff]
    %v67 = vld [vmem:[%s1 + $0x118] sm:$0xff]
    %v68 = vld [vmem:[%s1 + $0x120] sm:$0xff]
    %v69 = vld [vmem:[%s1 + $0x128] sm:$0xff]
    %v70 = vld [vmem:[%s1 + $0x130] sm:$0xff]
    %v71 = vld [vmem:[%s1 + $0x138] sm:$0xff]
    %v72 = vld [vmem:[%s1 + $0x140] sm:$0xff]
    %v73 = vld [vmem:[%s1 + $0x148] sm:$0xff]
    %v74 = vld [vmem:[%s1 + $0x150] sm:$0xff]
    %v75 = vld [vmem:[%s1 + $0x158] sm:$0xff]
    %v76 = vld [vmem:[%s1 + $0x160] sm:$0xff]
    %v77 = vld [vmem:[%s1 + $0x168] sm:$0xff]
    %v78 = vld [vmem:[%s1 + $0x170] sm:$0xff]
    %v79 = vld [vmem:[%s1 + $0x178] sm:$0xff]
    %v80 = vld [vmem:[%s1 + $0x180] sm:$0xff]
    %v81 = vld [vmem:[%s1 + $0x188] sm:$0xff]
    %v82 = vld [vmem:[%s1 + $0x190] sm:$0xff]
    %v83 = vld [vmem:[%s1 + $0x198] sm:$0xff]
    %v84 = vld [vmem:[%s1 + $0x1a0] sm:$0xff]
    %v85 = vld [vmem:[%s1 + $0x1a8] sm:$0xff]
    %v86 = vld [vmem:[%s1 + $0x1b0] sm:$0xff]
    %v87 = vld [vmem:[%s1 + $0x1b8] sm:$0xff]
    %v88 = vld [vmem:[%s1 + $0x1c0] sm:$0xff]
    %v89 = vld [vmem:[%s1 + $0x1c8] sm:$0xff]
    %v90 = vld [vmem:[%s1 + $0x1d0] sm:$0xff]
    %v91 = vld [vmem:[%s1 + $0x1d8] sm:$0xff]
    %v92 = vld [vmem:[%s1 + $0x1e0] sm:$0xff]
    %v93 = vld [vmem:[%s1 + $0x1e8] sm:$0xff]
    %v94 = vld [vmem:[%s1 + $0x1f0] sm:$0xff]
    %v95 = vld [vmem:[%s1 + $0x1f8] sm:$0xff]
    %v96 = vld [vmem:[%s1 + $0x200] sm:$0xff]
    %v97 = vld [vmem:[%s1 + $0x208] sm:$0xff]
    %v98 = vld [vmem:[%s1 + $0x210] sm:$0xff]
    %v99 = vld [vmem:[%s1 + $0x218] sm:$0xff]
    %v100 = vld [vmem:[%s1 + $0x220] sm:$0xff]
    %v101 = vld [vmem:[%s1 + $0x228] sm:$0xff]
    %v102 = vld [vmem:[%s1 + $0x230] sm:$0xff]
    %v103 = vld [vmem:[%s1 + $0x238] sm:$0xff]
    %v104 = vld [vmem:[%s1 + $0x240] sm:$0xff]
    %v105 = vld [vmem:[%s1 + $0x248] sm:$0xff]
    %v106 = vld [vmem:[%s1 + $0x250] sm:$0xff]
    %v107 = vld [vmem:[%s1 + $0x258] sm:$0xff]
    %v108 = vld [vmem:[%s1 + $0x260] sm:$0xff]
    %v109 = vld [vmem:[%s1 + $0x268] sm:$0xff]
    %v110 = vld [vmem:[%s1 + $0x270] sm:$0xff]
    %v111 = vld [vmem:[%s1 + $0x278] sm:$0xff]
    %v112 = vld [vmem:[%s1 + $0x280] sm:$0xff]
    %v113 = vld [vmem:[%s1 + $0x288] sm:$0xff]
    %v114 = vld [vmem:[%s1 + $0x290] sm:$0xff]
    %v115 = vld [vmem:[%s1 + $0x298] sm:$0xff]
    %v116 = vld [vmem:[%s1 + $0x2a0] sm:$0xff]
    %v117 = vld [vmem:[%s1 + $0x2a8] sm:$0xff]
    %v118 = vld [vmem:[%s1 + $0x2b0] sm:$0xff]
    %v119 = vld [vmem:[%s1 + $0x2b8] sm:$0xff]
    %v120 = vld [vmem:[%s1 + $0x2c0] sm:$0xff]
    %v121 = vld [vmem:[%s1 + $0x2c8] sm:$0xff]
    %v122 = vld [vmem:[%s1 + $0x2d0] sm:$0xff]
    %v123 = vld [vmem:[%s1 + $0x2d8] sm:$0xff]
    %v124 = vld [vmem:[%s1 + $0x2e0] sm:$0xff]
    %v125 = vld [vmem:[%s1 + $0x2e8] sm:$0xff]
    %v126 = vld [vmem:[%s1 + $0x2f0] sm:$0xff]
    %v127 = vld [vmem:[%s1 + $0x2f8] sm:$0xff]
    %v128 = vld [vmem:[%s1 + $0x300] sm:$0xff]
    %v129 = vld [vmem:[%s1 + $0x308] sm:$0xff]
    %v130 = vld [vmem:[%s1 + $0x310] sm:$0xff]
    %v131 = vld [vmem:[%s1 + $0x318] sm:$0xff]
    %v132 = vld [vmem:[%s1 + $0x320] sm:$0xff]
    %v133 = vld [vmem:[%s1 + $0x328] sm:$0xff]
    %v134 = vld [vmem:[%s1 + $0x330] sm:$0xff]
    %v135 = vld [vmem:[%s1 + $0x338] sm:$0xff]
    %v136 = vld [vmem:[%s1 + $0x340] sm:$0xff]
    %v137 = vld [vmem:[%s1 + $0x348] sm:$0xff]
    %v138 = vld [vmem:[%s1 + $0x350] sm:$0xff]
    %v139 = vld [vmem:[%s1 + $0x358] sm:$0xff]
    %v140 = vld [vmem:[%s1 + $0x360] sm:$0xff]
    %v141 = vld [vmem:[%s1 + $0x368] sm:$0xff]
    %v142 = vld [vmem:[%s1 + $0x370] sm:$0xff]
    %v143 = vld [vmem:[%s1 + $0x378] sm:$0xff]
    %v144 = vld [vmem:[%s2] sm:$0x3]
    %v146 = vperm.slane %v144, 0
    %v147 = vperm.slane %v144, 1
    %v154 = vunpack.c.l.b16 %v28
    %v155 = vunpack.c.h.b16 %v28
    %v156 = vunpack.c.l.b16 %v29
    %v157 = vunpack.c.h.b16 %v29
    %v158 = vunpack.c.l.b16 %v30
    %v159 = vunpack.c.h.b16 %v30
    %v160 = vunpack.c.l.b16 %v31
    %v161 = vpack.c.b16 %v154, %v154
    %v162 = vpack.c.b16 %v155, %v155
    %v163 = vpack.c.b16 %v156, %v156
    %v164 = vpack.c.b16 %v157, %v157
    %v165 = vpack.c.b16 %v158, %v158
    %v166 = vpack.c.b16 %v159, %v159
    %v167 = vpack.c.b16 %v160, %v160
    %v287 = vunpack.c.l.b16 %v32
    %v288 = vunpack.c.h.b16 %v32
    %v289 = vunpack.c.l.b16 %v33
    %v290 = vunpack.c.h.b16 %v33
    %v291 = vunpack.c.l.b16 %v34
    %v292 = vunpack.c.h.b16 %v34
    %v293 = vunpack.c.l.b16 %v35
    %v294 = vunpack.c.h.b16 %v35
    %v295 = vunpack.c.l.b16 %v36
    %v296 = vunpack.c.h.b16 %v36
    %v297 = vunpack.c.l.b16 %v37
    %v298 = vunpack.c.h.b16 %v37
    %v299 = vunpack.c.l.b16 %v38
    %v300 = vunpack.c.h.b16 %v38
    %v301 = vunpack.c.l.b16 %v39
    %v302 = vunpack.c.h.b16 %v39
    %v303 = vunpack.c.l.b16 %v40
    %v304 = vunpack.c.h.b16 %v40
    %v305 = vunpack.c.l.b16 %v41
    %v306 = vunpack.c.h.b16 %v41
    %v307 = vunpack.c.l.b16 %v42
    %v308 = vunpack.c.h.b16 %v42
    %v309 = vunpack.c.l.b16 %v43
    %v310 = vunpack.c.h.b16 %v43
    %v311 = vunpack.c.l.b16 %v44
    %v312 = vunpack.c.h.b16 %v44
    %v313 = vunpack.c.l.b16 %v45
    %v314 = vunpack.c.h.b16 %v45
    %v315 = vunpack.c.l.b16 %v46
    %v316 = vunpack.c.h.b16 %v46
    %v317 = vunpack.c.l.b16 %v47
    %v318 = vunpack.c.h.b16 %v47
    %v319 = vunpack.c.l.b16 %v48
    %v320 = vunpack.c.h.b16 %v48
    %v321 = vunpack.c.l.b16 %v49
    %v322 = vunpack.c.h.b16 %v49
    %v323 = vunpack.c.l.b16 %v50
    %v324 = vunpack.c.h.b16 %v50
    %v325 = vunpack.c.l.b16 %v51
    %v326 = vunpack.c.h.b16 %v51
    %v327 = vunpack.c.l.b16 %v52
    %v328 = vunpack.c.h.b16 %v52
    %v329 = vunpack.c.l.b16 %v53
    %v330 = vunpack.c.h.b16 %v53
    %v331 = vunpack.c.l.b16 %v54
    %v332 = vunpack.c.h.b16 %v54
    %v333 = vunpack.c.l.b16 %v55
    %v334 = vunpack.c.h.b16 %v55
    %v335 = vunpack.c.l.b16 %v56
    %v336 = vunpack.c.h.b16 %v56
    %v337 = vunpack.c.l.b16 %v57
    %v338 = vunpack.c.h.b16 %v57
    %v339 = vunpack.c.l.b16 %v58
    %v340 = vunpack.c.h.b16 %v58
    %v341 = vunpack.c.l.b16 %v59
    %v342 = vunpack.c.h.b16 %v59
    %v343 = vunpack.c.l.b16 %v60
    %v344 = vunpack.c.h.b16 %v60
    %v345 = vunpack.c.l.b16 %v61
    %v346 = vunpack.c.h.b16 %v61
    %v347 = vunpack.c.l.b16 %v62
    %v348 = vunpack.c.h.b16 %v62
    %v349 = vunpack.c.l.b16 %v63
    %v350 = vunpack.c.h.b16 %v63
    %v351 = vunpack.c.l.b16 %v64
    %v352 = vunpack.c.h.b16 %v64
    %v353 = vunpack.c.l.b16 %v65
    %v354 = vunpack.c.h.b16 %v65
    %v355 = vunpack.c.l.b16 %v66
    %v356 = vunpack.c.h.b16 %v66
    %v357 = vunpack.c.l.b16 %v67
    %v358 = vunpack.c.h.b16 %v67
    %v359 = vunpack.c.l.b16 %v68
    %v360 = vunpack.c.h.b16 %v68
    %v361 = vunpack.c.l.b16 %v69
    %v362 = vunpack.c.h.b16 %v69
    %v363 = vunpack.c.l.b16 %v70
    %v364 = vunpack.c.h.b16 %v70
    %v365 = vunpack.c.l.b16 %v71
    %v366 = vunpack.c.h.b16 %v71
    %v367 = vunpack.c.l.b16 %v72
    %v368 = vunpack.c.h.b16 %v72
    %v369 = vunpack.c.l.b16 %v73
    %v370 = vunpack.c.h.b16 %v73
    %v371 = vunpack.c.l.b16 %v74
    %v372 = vunpack.c.h.b16 %v74
    %v373 = vunpack.c.l.b16 %v75
    %v374 = vunpack.c.h.b16 %v75
    %v375 = vunpack.c.l.b16 %v76
    %v376 = vunpack.c.h.b16 %v76
    %v377 = vunpack.c.l.b16 %v77
    %v378 = vunpack.c.h.b16 %v77
    %v379 = vunpack.c.l.b16 %v78
    %v380 = vunpack.c.h.b16 %v78
    %v381 = vunpack.c.l.b16 %v79
    %v382 = vunpack.c.h.b16 %v79
    %v383 = vunpack.c.l.b16 %v80
    %v384 = vunpack.c.h.b16 %v80
    %v385 = vunpack.c.l.b16 %v81
    %v386 = vunpack.c.h.b16 %v81
    %v387 = vunpack.c.l.b16 %v82
    %v388 = vunpack.c.h.b16 %v82
    %v389 = vunpack.c.l.b16 %v83
    %v390 = vunpack.c.h.b16 %v83
    %v391 = vunpack.c.l.b16 %v84
    %v392 = vunpack.c.h.b16 %v84
    %v393 = vunpack.c.l.b16 %v85
    %v394 = vunpack.c.h.b16 %v85
    %v395 = vunpack.c.l.b16 %v86
    %v396 = vunpack.c.h.b16 %v86
    %v397 = vunpack.c.l.b16 %v87
    %v398 = vunpack.c.h.b16 %v87
    %v399 = vunpack.c.l.b16 %v88
    %v400 = vunpack.c.h.b16 %v88
    %v401 = vunpack.c.l.b16 %v89
    %v402 = vunpack.c.h.b16 %v89
    %v403 = vunpack.c.l.b16 %v90
    %v404 = vunpack.c.h.b16 %v90
    %v405 = vunpack.c.l.b16 %v91
    %v406 = vunpack.c.h.b16 %v91
    %v407 = vunpack.c.l.b16 %v92
    %v408 = vunpack.c.h.b16 %v92
    %v409 = vunpack.c.l.b16 %v93
    %v410 = vunpack.c.h.b16 %v93
    %v411 = vunpack.c.l.b16 %v94
    %v412 = vunpack.c.h.b16 %v94
    %v413 = vunpack.c.l.b16 %v95
    %v414 = vunpack.c.h.b16 %v95
    %v415 = vunpack.c.l.b16 %v96
    %v416 = vunpack.c.h.b16 %v96
    %v417 = vunpack.c.l.b16 %v97
    %v418 = vunpack.c.h.b16 %v97
    %v419 = vunpack.c.l.b16 %v98
    %v420 = vunpack.c.h.b16 %v98
    %v421 = vunpack.c.l.b16 %v99
    %v422 = vunpack.c.h.b16 %v99
    %v423 = vunpack.c.l.b16 %v100
    %v424 = vunpack.c.h.b16 %v100
    %v425 = vunpack.c.l.b16 %v101
    %v426 = vunpack.c.h.b16 %v101
    %v427 = vunpack.c.l.b16 %v102
    %v428 = vunpack.c.h.b16 %v102
    %v429 = vunpack.c.l.b16 %v103
    %v430 = vunpack.c.h.b16 %v103
    %v431 = vunpack.c.l.b16 %v104
    %v432 = vunpack.c.h.b16 %v104
    %v433 = vunpack.c.l.b16 %v105
    %v434 = vunpack.c.h.b16 %v105
    %v435 = vunpack.c.l.b16 %v106
    %v436 = vunpack.c.h.b16 %v106
    %v437 = vunpack.c.l.b16 %v107
    %v438 = vunpack.c.h.b16 %v107
    %v439 = vunpack.c.l.b16 %v108
    %v440 = vunpack.c.h.b16 %v108
    %v441 = vunpack.c.l.b16 %v109
    %v442 = vunpack.c.h.b16 %v109
    %v443 = vunpack.c.l.b16 %v110
    %v444 = vunpack.c.h.b16 %v110
    %v445 = vunpack.c.l.b16 %v111
    %v446 = vunpack.c.h.b16 %v111
    %v447 = vunpack.c.l.b16 %v112
    %v448 = vunpack.c.h.b16 %v112
    %v449 = vunpack.c.l.b16 %v113
    %v450 = vunpack.c.h.b16 %v113
    %v451 = vunpack.c.l.b16 %v114
    %v452 = vunpack.c.h.b16 %v114
    %v453 = vunpack.c.l.b16 %v115
    %v454 = vunpack.c.h.b16 %v115
    %v455 = vunpack.c.l.b16 %v116
    %v456 = vunpack.c.h.b16 %v116
    %v457 = vunpack.c.l.b16 %v117
    %v458 = vunpack.c.h.b16 %v117
    %v459 = vunpack.c.l.b16 %v118
    %v460 = vunpack.c.h.b16 %v118
    %v461 = vunpack.c.l.b16 %v119
    %v462 = vunpack.c.h.b16 %v119
    %v463 = vunpack.c.l.b16 %v120
    %v464 = vunpack.c.h.b16 %v120
    %v465 = vunpack.c.l.b16 %v121
    %v466 = vunpack.c.h.b16 %v121
    %v467 = vunpack.c.l.b16 %v122
    %v468 = vunpack.c.h.b16 %v122
    %v469 = vunpack.c.l.b16 %v123
    %v470 = vunpack.c.h.b16 %v123
    %v471 = vunpack.c.l.b16 %v124
    %v472 = vunpack.c.h.b16 %v124
    %v473 = vunpack.c.l.b16 %v125
    %v474 = vunpack.c.h.b16 %v125
    %v475 = vunpack.c.l.b16 %v126
    %v476 = vunpack.c.h.b16 %v126
    %v477 = vunpack.c.l.b16 %v127
    %v478 = vunpack.c.h.b16 %v127
    %v479 = vunpack.c.l.b16 %v128
    %v480 = vunpack.c.h.b16 %v128
    %v481 = vunpack.c.l.b16 %v129
    %v482 = vunpack.c.h.b16 %v129
    %v483 = vunpack.c.l.b16 %v130
    %v484 = vunpack.c.h.b16 %v130
    %v485 = vunpack.c.l.b16 %v131
    %v486 = vunpack.c.h.b16 %v131
    %v487 = vunpack.c.l.b16 %v132
    %v488 = vunpack.c.h.b16 %v132
    %v489 = vunpack.c.l.b16 %v133
    %v490 = vunpack.c.h.b16 %v133
    %v491 = vunpack.c.l.b16 %v134
    %v492 = vunpack.c.h.b16 %v134
    %v493 = vunpack.c.l.b16 %v135
    %v494 = vunpack.c.h.b16 %v135
    %v495 = vunpack.c.l.b16 %v136
    %v496 = vunpack.c.h.b16 %v136
    %v497 = vunpack.c.l.b16 %v137
    %v498 = vunpack.c.h.b16 %v137
    %v499 = vunpack.c.l.b16 %v138
    %v500 = vunpack.c.h.b16 %v138
    %v501 = vunpack.c.l.b16 %v139
    %v502 = vunpack.c.h.b16 %v139
    %v503 = vunpack.c.l.b16 %v140
    %v504 = vunpack.c.h.b16 %v140
    %v505 = vunpack.c.l.b16 %v141
    %v506 = vunpack.c.h.b16 %v141
    %v507 = vunpack.c.l.b16 %v142
    %v508 = vunpack.c.h.b16 %v142
    %v509 = vunpack.c.l.b16 %v143
    %v510 = vunpack.c.h.b16 %v143
    %v511 = vpack.c.b16 %v289, %v287
    %v512 = vpack.c.b16 %v290, %v288
    %v513 = vpack.c.b16 %v293, %v291
    %v514 = vpack.c.b16 %v294, %v292
    %v515 = vpack.c.b16 %v297, %v295
    %v516 = vpack.c.b16 %v298, %v296
    %v517 = vpack.c.b16 %v301, %v299
    %v518 = vpack.c.b16 %v302, %v300
    %v519 = vpack.c.b16 %v305, %v303
    %v520 = vpack.c.b16 %v306, %v304
    %v521 = vpack.c.b16 %v309, %v307
    %v522 = vpack.c.b16 %v310, %v308
    %v523 = vpack.c.b16 %v313, %v311
    %v524 = vpack.c.b16 %v314, %v312
    %v525 = vpack.c.b16 %v317, %v315
    %v526 = vpack.c.b16 %v318, %v316
    %v527 = vpack.c.b16 %v321, %v319
    %v528 = vpack.c.b16 %v322, %v320
    %v529 = vpack.c.b16 %v325, %v323
    %v530 = vpack.c.b16 %v326, %v324
    %v531 = vpack.c.b16 %v329, %v327
    %v532 = vpack.c.b16 %v330, %v328
    %v533 = vpack.c.b16 %v333, %v331
    %v534 = vpack.c.b16 %v334, %v332
    %v535 = vpack.c.b16 %v337, %v335
    %v536 = vpack.c.b16 %v338, %v336
    %v537 = vpack.c.b16 %v341, %v339
    %v538 = vpack.c.b16 %v342, %v340
    %v539 = vpack.c.b16 %v345, %v343
    %v540 = vpack.c.b16 %v346, %v344
    %v541 = vpack.c.b16 %v349, %v347
    %v542 = vpack.c.b16 %v350, %v348
    %v543 = vpack.c.b16 %v353, %v351
    %v544 = vpack.c.b16 %v354, %v352
    %v545 = vpack.c.b16 %v357, %v355
    %v546 = vpack.c.b16 %v358, %v356
    %v547 = vpack.c.b16 %v361, %v359
    %v548 = vpack.c.b16 %v362, %v360
    %v549 = vpack.c.b16 %v365, %v363
    %v550 = vpack.c.b16 %v366, %v364
    %v551 = vpack.c.b16 %v369, %v367
    %v552 = vpack.c.b16 %v370, %v368
    %v553 = vpack.c.b16 %v373, %v371
    %v554 = vpack.c.b16 %v374, %v372
    %v555 = vpack.c.b16 %v377, %v375
    %v556 = vpack.c.b16 %v378, %v376
    %v557 = vpack.c.b16 %v381, %v379
    %v558 = vpack.c.b16 %v382, %v380
    %v559 = vpack.c.b16 %v385, %v383
    %v560 = vpack.c.b16 %v386, %v384
    %v561 = vpack.c.b16 %v389, %v387
    %v562 = vpack.c.b16 %v390, %v388
    %v563 = vpack.c.b16 %v393, %v391
    %v564 = vpack.c.b16 %v394, %v392
    %v565 = vpack.c.b16 %v397, %v395
    %v566 = vpack.c.b16 %v398, %v396
    %v567 = vpack.c.b16 %v401, %v399
    %v568 = vpack.c.b16 %v402, %v400
    %v569 = vpack.c.b16 %v405, %v403
    %v570 = vpack.c.b16 %v406, %v404
    %v571 = vpack.c.b16 %v409, %v407
    %v572 = vpack.c.b16 %v410, %v408
    %v573 = vpack.c.b16 %v413, %v411
    %v574 = vpack.c.b16 %v414, %v412
    %v575 = vpack.c.b16 %v417, %v415
    %v576 = vpack.c.b16 %v418, %v416
    %v577 = vpack.c.b16 %v421, %v419
    %v578 = vpack.c.b16 %v422, %v420
    %v579 = vpack.c.b16 %v425, %v423
    %v580 = vpack.c.b16 %v426, %v424
    %v581 = vpack.c.b16 %v429, %v427
    %v582 = vpack.c.b16 %v430, %v428
    %v583 = vpack.c.b16 %v433, %v431
    %v584 = vpack.c.b16 %v434, %v432
    %v585 = vpack.c.b16 %v437, %v435
    %v586 = vpack.c.b16 %v438, %v436
    %v587 = vpack.c.b16 %v441, %v439
    %v588 = vpack.c.b16 %v442, %v440
    %v589 = vpack.c.b16 %v445, %v443
    %v590 = vpack.c.b16 %v446, %v444
    %v591 = vpack.c.b16 %v449, %v447
    %v592 = vpack.c.b16 %v450, %v448
    %v593 = vpack.c.b16 %v453, %v451
    %v594 = vpack.c.b16 %v454, %v452
    %v595 = vpack.c.b16 %v457, %v455
    %v596 = vpack.c.b16 %v458, %v456
    %v597 = vpack.c.b16 %v461, %v459
    %v598 = vpack.c.b16 %v462, %v460
    %v599 = vpack.c.b16 %v465, %v463
    %v600 = vpack.c.b16 %v466, %v464
    %v601 = vpack.c.b16 %v469, %v467
    %v602 = vpack.c.b16 %v470, %v468
    %v603 = vpack.c.b16 %v473, %v471
    %v604 = vpack.c.b16 %v474, %v472
    %v605 = vpack.c.b16 %v477, %v475
    %v606 = vpack.c.b16 %v478, %v476
    %v607 = vpack.c.b16 %v481, %v479
    %v608 = vpack.c.b16 %v482, %v480
    %v609 = vpack.c.b16 %v485, %v483
    %v610 = vpack.c.b16 %v486, %v484
    %v611 = vpack.c.b16 %v489, %v487
    %v612 = vpack.c.b16 %v490, %v488
    %v613 = vpack.c.b16 %v493, %v491
    %v614 = vpack.c.b16 %v494, %v492
    %v615 = vpack.c.b16 %v497, %v495
    %v616 = vpack.c.b16 %v498, %v496
    %v617 = vpack.c.b16 %v501, %v499
    %v618 = vpack.c.b16 %v502, %v500
    %v619 = vpack.c.b16 %v505, %v503
    %v620 = vpack.c.b16 %v506, %v504
    %v621 = vpack.c.b16 %v509, %v507
    %v622 = vpack.c.b16 %v510, %v508
    %735 = vmatpush.bf16.msra.mxu0 %v525
    %736 = vmatpush.bf16.msra.mxu0 %v523
    %737 = vmatpush.bf16.msra.mxu0 %v521
    %738 = vmatpush.bf16.msra.mxu0 %v519
    %739 = vmatpush.bf16.msra.mxu0 %v517
    %740 = vmatpush.bf16.msra.mxu0 %v515
    %741 = vmatpush.bf16.msra.mxu0 %v513
    %742 = vmatpush.bf16.msra.mxu0 %v511
    %743 = vmatmul.bf16.gmra.mxu0 %v161
    %v744 = vpop.f32.mrf.mxu0
    %v745 = vadd.f32 %v146, %v744
    %v746 = vpop.f32.mrf.mxu0
    %747 = vdwg.mxu0
    %748 = vmatpush.bf16.msra.mxu0 %v541
    %749 = vmatpush.bf16.msra.mxu0 %v539
    %750 = vmatpush.bf16.msra.mxu0 %v537
    %751 = vmatpush.bf16.msra.mxu0 %v535
    %752 = vmatpush.bf16.msra.mxu0 %v533
    %753 = vmatpush.bf16.msra.mxu0 %v531
    %754 = vmatpush.bf16.msra.mxu0 %v529
    %755 = vmatpush.bf16.msra.mxu0 %v527
    %756 = vmatmul.bf16.gmra.mxu0 %v162
    %v757 = vpop.f32.mrf.mxu0
    %v758 = vadd.f32 %v745, %v757
    %v759 = vpop.f32.mrf.mxu0
    %760 = vdwg.mxu0
    %761 = vmatpush.bf16.msra.mxu0 %v557
    %762 = vmatpush.bf16.msra.mxu0 %v555
    %763 = vmatpush.bf16.msra.mxu0 %v553
    %764 = vmatpush.bf16.msra.mxu0 %v551
    %765 = vmatpush.bf16.msra.mxu0 %v549
    %766 = vmatpush.bf16.msra.mxu0 %v547
    %767 = vmatpush.bf16.msra.mxu0 %v545
    %768 = vmatpush.bf16.msra.mxu0 %v543
    %769 = vmatmul.bf16.gmra.mxu0 %v163
    %v770 = vpop.f32.mrf.mxu0
    %v771 = vadd.f32 %v758, %v770
    %v772 = vpop.f32.mrf.mxu0
    %773 = vdwg.mxu0
    %774 = vmatpush.bf16.msra.mxu0 %v573
    %775 = vmatpush.bf16.msra.mxu0 %v571
    %776 = vmatpush.bf16.msra.mxu0 %v569
    %777 = vmatpush.bf16.msra.mxu0 %v567
    %778 = vmatpush.bf16.msra.mxu0 %v565
    %779 = vmatpush.bf16.msra.mxu0 %v563
    %780 = vmatpush.bf16.msra.mxu0 %v561
    %781 = vmatpush.bf16.msra.mxu0 %v559
    %782 = vmatmul.bf16.gmra.mxu0 %v164
    %v783 = vpop.f32.mrf.mxu0
    %v784 = vadd.f32 %v771, %v783
    %v785 = vpop.f32.mrf.mxu0
    %786 = vdwg.mxu0
    %787 = vmatpush.bf16.msra.mxu0 %v589
    %788 = vmatpush.bf16.msra.mxu0 %v587
    %789 = vmatpush.bf16.msra.mxu0 %v585
    %790 = vmatpush.bf16.msra.mxu0 %v583
    %791 = vmatpush.bf16.msra.mxu0 %v581
    %792 = vmatpush.bf16.msra.mxu0 %v579
    %793 = vmatpush.bf16.msra.mxu0 %v577
    %794 = vmatpush.bf16.msra.mxu0 %v575
    %795 = vmatmul.bf16.gmra.mxu0 %v165
    %v796 = vpop.f32.mrf.mxu0
    %v797 = vadd.f32 %v784, %v796
    %v798 = vpop.f32.mrf.mxu0
    %799 = vdwg.mxu0
    %800 = vmatpush.bf16.msra.mxu0 %v605
    %801 = vmatpush.bf16.msra.mxu0 %v603
    %802 = vmatpush.bf16.msra.mxu0 %v601
    %803 = vmatpush.bf16.msra.mxu0 %v599
    %804 = vmatpush.bf16.msra.mxu0 %v597
    %805 = vmatpush.bf16.msra.mxu0 %v595
    %806 = vmatpush.bf16.msra.mxu0 %v593
    %807 = vmatpush.bf16.msra.mxu0 %v591
    %808 = vmatmul.bf16.gmra.mxu0 %v166
    %v809 = vpop.f32.mrf.mxu0
    %v810 = vadd.f32 %v797, %v809
    %v811 = vpop.f32.mrf.mxu0
    %812 = vdwg.mxu0
    %813 = vmatpush.bf16.msra.mxu0 %v621
    %814 = vmatpush.bf16.msra.mxu0 %v619
    %815 = vmatpush.bf16.msra.mxu0 %v617
    %816 = vmatpush.bf16.msra.mxu0 %v615
    %817 = vmatpush.bf16.msra.mxu0 %v613
    %818 = vmatpush.bf16.msra.mxu0 %v611
    %819 = vmatpush.bf16.msra.mxu0 %v609
    %820 = vmatpush.bf16.msra.mxu0 %v607
    %821 = vmatmul.bf16.gmra.mxu0 %v167
    %v822 = vpop.f32.mrf.mxu0
    %v823 = vadd.f32 %v810, %v822
    %v824 = vpop.f32.mrf.mxu0
    %825 = vdwg.mxu0
    %826 = vmatpush.bf16.msra.mxu0 %v526
    %827 = vmatpush.bf16.msra.mxu0 %v524
    %828 = vmatpush.bf16.msra.mxu0 %v522
    %829 = vmatpush.bf16.msra.mxu0 %v520
    %830 = vmatpush.bf16.msra.mxu0 %v518
    %831 = vmatpush.bf16.msra.mxu0 %v516
    %832 = vmatpush.bf16.msra.mxu0 %v514
    %833 = vmatpush.bf16.msra.mxu0 %v512
    %834 = vmatmul.bf16.gmra.mxu0 %v161
    %v835 = vpop.f32.mrf.mxu0
    %v836 = vadd.f32 %v147, %v835
    %v837 = vpop.f32.mrf.mxu0
    %838 = vdwg.mxu0
    %839 = vmatpush.bf16.msra.mxu0 %v542
    %840 = vmatpush.bf16.msra.mxu0 %v540
    %841 = vmatpush.bf16.msra.mxu0 %v538
    %842 = vmatpush.bf16.msra.mxu0 %v536
    %843 = vmatpush.bf16.msra.mxu0 %v534
    %844 = vmatpush.bf16.msra.mxu0 %v532
    %845 = vmatpush.bf16.msra.mxu0 %v530
    %846 = vmatpush.bf16.msra.mxu0 %v528
    %847 = vmatmul.bf16.gmra.mxu0 %v162
    %v848 = vpop.f32.mrf.mxu0
    %v849 = vadd.f32 %v836, %v848
    %v850 = vpop.f32.mrf.mxu0
    %851 = vdwg.mxu0
    %852 = vmatpush.bf16.msra.mxu0 %v558
    %853 = vmatpush.bf16.msra.mxu0 %v556
    %854 = vmatpush.bf16.msra.mxu0 %v554
    %855 = vmatpush.bf16.msra.mxu0 %v552
    %856 = vmatpush.bf16.msra.mxu0 %v550
    %857 = vmatpush.bf16.msra.mxu0 %v548
    %858 = vmatpush.bf16.msra.mxu0 %v546
    %859 = vmatpush.bf16.msra.mxu0 %v544
    %860 = vmatmul.bf16.gmra.mxu0 %v163
    %v861 = vpop.f32.mrf.mxu0
    %v862 = vadd.f32 %v849, %v861
    %v863 = vpop.f32.mrf.mxu0
    %864 = vdwg.mxu0
    %865 = vmatpush.bf16.msra.mxu0 %v574
    %866 = vmatpush.bf16.msra.mxu0 %v572
    %867 = vmatpush.bf16.msra.mxu0 %v570
    %868 = vmatpush.bf16.msra.mxu0 %v568
    %869 = vmatpush.bf16.msra.mxu0 %v566
    %870 = vmatpush.bf16.msra.mxu0 %v564
    %871 = vmatpush.bf16.msra.mxu0 %v562
    %872 = vmatpush.bf16.msra.mxu0 %v560
    %873 = vmatmul.bf16.gmra.mxu0 %v164
    %v874 = vpop.f32.mrf.mxu0
    %v875 = vadd.f32 %v862, %v874
    %v876 = vpop.f32.mrf.mxu0
    %877 = vdwg.mxu0
    %878 = vmatpush.bf16.msra.mxu0 %v590
    %879 = vmatpush.bf16.msra.mxu0 %v588
    %880 = vmatpush.bf16.msra.mxu0 %v586
    %881 = vmatpush.bf16.msra.mxu0 %v584
    %882 = vmatpush.bf16.msra.mxu0 %v582
    %883 = vmatpush.bf16.msra.mxu0 %v580
    %884 = vmatpush.bf16.msra.mxu0 %v578
    %885 = vmatpush.bf16.msra.mxu0 %v576
    %886 = vmatmul.bf16.gmra.mxu0 %v165
    %v887 = vpop.f32.mrf.mxu0
    %v888 = vadd.f32 %v875, %v887
    %v889 = vpop.f32.mrf.mxu0
    %890 = vdwg.mxu0
    %891 = vmatpush.bf16.msra.mxu0 %v606
    %892 = vmatpush.bf16.msra.mxu0 %v604
    %893 = vmatpush.bf16.msra.mxu0 %v602
    %894 = vmatpush.bf16.msra.mxu0 %v600
    %895 = vmatpush.bf16.msra.mxu0 %v598
    %896 = vmatpush.bf16.msra.mxu0 %v596
    %897 = vmatpush.bf16.msra.mxu0 %v594
    %898 = vmatpush.bf16.msra.mxu0 %v592
    %899 = vmatmul.bf16.gmra.mxu0 %v166
    %v900 = vpop.f32.mrf.mxu0
    %v901 = vadd.f32 %v888, %v900
    %v902 = vpop.f32.mrf.mxu0
    %903 = vdwg.mxu0
    %904 = vmatpush.bf16.msra.mxu0 %v622
    %905 = vmatpush.bf16.msra.mxu0 %v620
    %906 = vmatpush.bf16.msra.mxu0 %v618
    %907 = vmatpush.bf16.msra.mxu0 %v616
    %908 = vmatpush.bf16.msra.mxu0 %v614
    %909 = vmatpush.bf16.msra.mxu0 %v612
    %910 = vmatpush.bf16.msra.mxu0 %v610
    %911 = vmatpush.bf16.msra.mxu0 %v608
    %912 = vmatmul.bf16.gmra.mxu0 %v167
    %v913 = vpop.f32.mrf.mxu0
    %v914 = vadd.f32 %v901, %v913
    %v915 = vpop.f32.mrf.mxu0
    %916 = vdwg.mxu0
    %vm917 = vcmp.gt.f32.partialorder %v823, 0.0
    %vm918 = vcmp.gt.f32.partialorder %v914, 0.0
    %v919 = vmul.f32 %v823, 0.01
    %v920 = vmul.f32 %v914, 0.01
    %v921 = vsel %vm917, %v823, %v919
    %v922 = vsel %vm918, %v914, %v920
    %v923 = vpack.c.bf16 %v921, %v921
    %v924 = vpack.c.bf16 %v922, %v922
    %v925 = vld [vmem:[%s3] sm:$0xf]
    %v926 = vld [vmem:[%s3 + $0x4] sm:$0xf]
    %v927 = vld [vmem:[%s3 + $0x8] sm:$0xf]
    %v928 = vld [vmem:[%s3 + $0xc] sm:$0xf]
    %v929 = vld [vmem:[%s3 + $0x10] sm:$0xf]
    %v930 = vld [vmem:[%s3 + $0x14] sm:$0xf]
    %v931 = vld [vmem:[%s3 + $0x18] sm:$0xf]
    %v932 = vld [vmem:[%s3 + $0x1c] sm:$0xf]
    %v933 = vld [vmem:[%s3 + $0x20] sm:$0xf]
    %v934 = vld [vmem:[%s3 + $0x24] sm:$0xf]
    %v935 = vld [vmem:[%s3 + $0x28] sm:$0xf]
    %v936 = vld [vmem:[%s3 + $0x2c] sm:$0xf]
    %v937 = vld [vmem:[%s3 + $0x30] sm:$0xf]
    %v938 = vld [vmem:[%s3 + $0x34] sm:$0xf]
    %v939 = vld [vmem:[%s3 + $0x38] sm:$0xf]
    %v940 = vld [vmem:[%s3 + $0x3c] sm:$0xf]
    %v941 = vld [vmem:[%s3 + $0x40] sm:$0xf]
    %v942 = vld [vmem:[%s3 + $0x44] sm:$0xf]
    %v943 = vld [vmem:[%s3 + $0x48] sm:$0xf]
    %v944 = vld [vmem:[%s3 + $0x4c] sm:$0xf]
    %v945 = vld [vmem:[%s3 + $0x50] sm:$0xf]
    %v946 = vld [vmem:[%s3 + $0x54] sm:$0xf]
    %v947 = vld [vmem:[%s3 + $0x58] sm:$0xf]
    %v948 = vld [vmem:[%s3 + $0x5c] sm:$0xf]
    %v949 = vld [vmem:[%s3 + $0x60] sm:$0xf]
    %v950 = vld [vmem:[%s3 + $0x64] sm:$0xf]
    %v951 = vld [vmem:[%s3 + $0x68] sm:$0xf]
    %v952 = vld [vmem:[%s3 + $0x6c] sm:$0xf]
    %v953 = vld [vmem:[%s3 + $0x70] sm:$0xf]
    %v954 = vld [vmem:[%s3 + $0x74] sm:$0xf]
    %v955 = vld [vmem:[%s3 + $0x78] sm:$0xf]
    %v956 = vld [vmem:[%s3 + $0x7c] sm:$0xf]
    %v957 = vld [vmem:[%s4] sm:$0x1]
    %v959 = vperm.slane %v957, 0
    %v993 = vunpack.c.l.b16 %v925
    %v994 = vunpack.c.l.b16 %v926
    %v995 = vunpack.c.l.b16 %v927
    %v996 = vunpack.c.l.b16 %v928
    %v997 = vunpack.c.l.b16 %v929
    %v998 = vunpack.c.l.b16 %v930
    %v999 = vunpack.c.l.b16 %v931
    %v1000 = vunpack.c.l.b16 %v932
    %v1001 = vunpack.c.l.b16 %v933
    %v1002 = vunpack.c.l.b16 %v934
    %v1003 = vunpack.c.l.b16 %v935
    %v1004 = vunpack.c.l.b16 %v936
    %v1005 = vunpack.c.l.b16 %v937
    %v1006 = vunpack.c.l.b16 %v938
    %v1007 = vunpack.c.l.b16 %v939
    %v1008 = vunpack.c.l.b16 %v940
    %v1009 = vunpack.c.l.b16 %v941
    %v1010 = vunpack.c.l.b16 %v942
    %v1011 = vunpack.c.l.b16 %v943
    %v1012 = vunpack.c.l.b16 %v944
    %v1013 = vunpack.c.l.b16 %v945
    %v1014 = vunpack.c.l.b16 %v946
    %v1015 = vunpack.c.l.b16 %v947
    %v1016 = vunpack.c.l.b16 %v948
    %v1017 = vunpack.c.l.b16 %v949
    %v1018 = vunpack.c.l.b16 %v950
    %v1019 = vunpack.c.l.b16 %v951
    %v1020 = vunpack.c.l.b16 %v952
    %v1021 = vunpack.c.l.b16 %v953
    %v1022 = vunpack.c.l.b16 %v954
    %v1023 = vunpack.c.l.b16 %v955
    %v1024 = vunpack.c.l.b16 %v956
    %v1025 = vpack.c.b16 %v994, %v993
    %v1026 = vpack.c.b16 %v996, %v995
    %v1027 = vpack.c.b16 %v998, %v997
    %v1028 = vpack.c.b16 %v1000, %v999
    %v1029 = vpack.c.b16 %v1002, %v1001
    %v1030 = vpack.c.b16 %v1004, %v1003
    %v1031 = vpack.c.b16 %v1006, %v1005
    %v1032 = vpack.c.b16 %v1008, %v1007
    %v1033 = vpack.c.b16 %v1010, %v1009
    %v1034 = vpack.c.b16 %v1012, %v1011
    %v1035 = vpack.c.b16 %v1014, %v1013
    %v1036 = vpack.c.b16 %v1016, %v1015
    %v1037 = vpack.c.b16 %v1018, %v1017
    %v1038 = vpack.c.b16 %v1020, %v1019
    %v1039 = vpack.c.b16 %v1022, %v1021
    %v1040 = vpack.c.b16 %v1024, %v1023
    %1057 = vmatpush.bf16.msra.mxu0 %v1032
    %1058 = vmatpush.bf16.msra.mxu0 %v1031
    %1059 = vmatpush.bf16.msra.mxu0 %v1030
    %1060 = vmatpush.bf16.msra.mxu0 %v1029
    %1061 = vmatpush.bf16.msra.mxu0 %v1028
    %1062 = vmatpush.bf16.msra.mxu0 %v1027
    %1063 = vmatpush.bf16.msra.mxu0 %v1026
    %1064 = vmatpush.bf16.msra.mxu0 %v1025
    %1065 = vmatmul.bf16.gmra.mxu0 %v923
    %v1066 = vpop.f32.mrf.mxu0
    %v1067 = vadd.f32 %v959, %v1066
    %v1068 = vpop.f32.mrf.mxu0
    %1069 = vdwg.mxu0
    %1070 = vmatpush.bf16.msra.mxu0 %v1040
    %1071 = vmatpush.bf16.msra.mxu0 %v1039
    %1072 = vmatpush.bf16.msra.mxu0 %v1038
    %1073 = vmatpush.bf16.msra.mxu0 %v1037
    %1074 = vmatpush.bf16.msra.mxu0 %v1036
    %1075 = vmatpush.bf16.msra.mxu0 %v1035
    %1076 = vmatpush.bf16.msra.mxu0 %v1034
    %1077 = vmatpush.bf16.msra.mxu0 %v1033
    %1078 = vmatmul.bf16.gmra.mxu0 %v924
    %v1079 = vpop.f32.mrf.mxu0
    %v1080 = vadd.f32 %v1067, %v1079
    %v1081 = vpop.f32.mrf.mxu0
    %1082 = vdwg.mxu0
    %vm1083 = vcmp.gt.f32.partialorder %v1080, 0.0
    %v1084 = vmul.f32 %v1080, 0.01
    %v1085 = vsel %vm1083, %v1080, %v1084
    %v1086 = vpack.c.bf16 %v1085, %v1085
    %v1087 = vld [vmem:[%s5] sm:$0xf]
    %v1088 = vld [vmem:[%s5 + $0x4] sm:$0xf]
    %v1089 = vld [vmem:[%s5 + $0x8] sm:$0xf]
    %v1090 = vld [vmem:[%s5 + $0xc] sm:$0xf]
    %v1091 = vld [vmem:[%s5 + $0x10] sm:$0xf]
    %v1092 = vld [vmem:[%s5 + $0x14] sm:$0xf]
    %v1093 = vld [vmem:[%s5 + $0x18] sm:$0xf]
    %v1094 = vld [vmem:[%s5 + $0x1c] sm:$0xf]
    %v1095 = vld [vmem:[%s6] sm:$0x1]
    %v1097 = vperm.slane %v1095, 0
    %v1107 = vunpack.c.l.b16 %v1087
    %v1108 = vunpack.c.l.b16 %v1088
    %v1109 = vunpack.c.l.b16 %v1089
    %v1110 = vunpack.c.l.b16 %v1090
    %v1111 = vunpack.c.l.b16 %v1091
    %v1112 = vunpack.c.l.b16 %v1092
    %v1113 = vunpack.c.l.b16 %v1093
    %v1114 = vunpack.c.l.b16 %v1094
    %v1115 = vpack.c.b16 %v1108, %v1107
    %v1116 = vpack.c.b16 %v1110, %v1109
    %v1117 = vpack.c.b16 %v1112, %v1111
    %v1118 = vpack.c.b16 %v1114, %v1113
    %vm1123 = vcmask 523264
    %v1125 = vsel %vm1123, %v1086, 0
    %1127 = vmatpush.bf16.msra.mxu0 0
    %1128 = vmatpush.bf16.msra.mxu0 0
    %1129 = vmatpush.bf16.msra.mxu0 0
    %1130 = vmatpush.bf16.msra.mxu0 0
    %1131 = vmatpush.bf16.msra.mxu0 %v1118
    %1132 = vmatpush.bf16.msra.mxu0 %v1117
    %1133 = vmatpush.bf16.msra.mxu0 %v1116
    %1134 = vmatpush.bf16.msra.mxu0 %v1115
    %1135 = vmatmul.bf16.gmra.mxu0 %v1125
    %v1136 = vpop.f32.mrf.mxu0
    %v1137 = vadd.f32 %v1097, %v1136
    %v1138 = vpop.f32.mrf.mxu0
    %1139 = vdwg.mxu0
    %1140 = vst [vmem:[#allocation2] sm:$0xff] %v1137
    // Predicated region
    $region30: #{feedforward_mnist.1} parent=1 // pred_check
      _
    $region31: #{feedforward_mnist.1} parent=1 // pred_check_branch
      %1142 = sbr.rel (0) target = $region33
    $region32: #{feedforward_mnist.1} parent=1 // pred_region
      %1144 = vsyncadd [#allocation3], 0
      %s1146 = sshll.u32 [#allocation2], 4
      %s1147 = int_to_ptr.vmem [resolvable:$true] %s1146
      %s1148 = sshll.u32 %s7, 4
      %s1149 = int_to_ptr.hbm [resolvable:$true] %s1148
      %1151 = dma.vmem_to_hbm [thread:$0]  %s1147, 128, %s1149, [#allocation3]
    $region33: #{feedforward_mnist.1} parent=1 // pred_fallthru
      _
    // Predicated region
    $region34: #{feedforward_mnist.1} parent=1 // pred_check
      _
    $region35: #{feedforward_mnist.1} parent=1 // pred_check_branch
      %1153 = sbr.rel (0) target = $region37
    $region36: #{feedforward_mnist.1} parent=1 // pred_region
      %1155 = dma.done [#allocation3], 128
    $region37: #{feedforward_mnist.1} parent=1 // pred_fallthru
      _
    %1156 = vsyncpa [#allocation3], 1

</llo_original>
